<compile_context>
chip_gen: v5e
topology: v5e:2x2
jax: 0.10.0
libtpu: 0.0.40
codegen_flags: <defaults>
</compile_context>

<pallas_src>
import math
import functools

import jax
import jax.numpy as jnp
from jax import lax
from jax.experimental import pallas as pl
from jax.experimental.pallas import tpu as pltpu


def _round_up(n, m):
    return ((n + m - 1) // m) * m


def head_kernel(lamb_ref, x_ref, w_ref, o_ref, *, head_size, h_pad,
                compute_dtype):
    """Differential attention for a (Bb, T, C) block of batch elements.

    w_ref holds the five projection weights fused + zero-padded to
    (C, 5*h_pad) so the projection is a single lane-dense MXU matmul.
    """
    f32 = jnp.float32
    x = x_ref[...].astype(compute_dtype)          # (Bb, T, C)
    w = w_ref[...].astype(compute_dtype)          # (C, 5*Hp)

    # One fused projection matmul (contract C) -> (Bb, T, 5*Hp), f32 accum.
    proj = lax.dot_general(x, w, (((2,), (0,)), ((), ())),
                           preferred_element_type=f32)

    Hp = h_pad                                    # 128-aligned slices
    k1 = proj[:, :, 0 * Hp:1 * Hp]
    q1 = proj[:, :, 1 * Hp:2 * Hp]
    k2 = proj[:, :, 2 * Hp:3 * Hp]
    q2 = proj[:, :, 3 * Hp:4 * Hp]
    v = proj[:, :, 4 * Hp:5 * Hp]

    # PyTorch scales by the true head_size (k.shape[-1]), not the padded Hp.
    # (zero-padded columns contribute nothing to the contraction.)
    scale = head_size ** -0.5

    # q @ k^T without materializing a transpose: contract last dims, batch b.
    dn_qk = (((2,), (2,)), ((0,), (0,)))
    s1 = lax.dot_general(q1.astype(compute_dtype), k1.astype(compute_dtype),
                         dn_qk, preferred_element_type=f32) * scale
    s2 = lax.dot_general(q2.astype(compute_dtype), k2.astype(compute_dtype),
                         dn_qk, preferred_element_type=f32) * scale

    approx = jnp.dtype(compute_dtype) != jnp.dtype(jnp.float32)

    def softmax_last(s):                          # f32, numerically stable
        m = jnp.max(s, axis=-1, keepdims=True)
        e = jnp.exp(s - m)
        l = jnp.sum(e, axis=-1, keepdims=True)
        return e * pl.reciprocal(l, approx=approx)

    w1 = softmax_last(s1)
    w2 = softmax_last(s2)

    lamb = lamb_ref[0, 0]
    wei = w1 - lamb * w2                          # (Bb, T, T), kept in f32

    dn_av = (((2,), (1,)), ((0,), (0,)))
    out = lax.dot_general(wei.astype(compute_dtype), v.astype(compute_dtype),
                          dn_av, preferred_element_type=f32)   # (Bb, T, Hp)
    o_ref[...] = out.astype(o_ref.dtype)          # lane-dense (Hp % 128 == 0)


def head_forward(x, lamb, w_k1, w_q1, w_k2, w_q2, w_v, *,
                 compute_dtype=jnp.bfloat16, block_b=8):
    """x: (B, T, C) f32; lamb: scalar; weights: (C, H) f32. Returns (B, T, H)."""
    B, T, C = x.shape
    H = w_k1.shape[1]
    Hp = _round_up(H, 128)        # lane-dense projections / output block

    # Fuse (and zero-pad) the five projection weights -> (C, 5*Hp).
    pad = ((0, 0), (0, Hp - H))
    w_all = jnp.concatenate(
        [jnp.pad(w, pad) for w in (w_k1, w_q1, w_k2, w_q2, w_v)], axis=1)

    Bb = math.gcd(B, block_b)     # batch elements per grid step
    lamb_arr = jnp.asarray(lamb, dtype=jnp.float32).reshape(1, 1)

    kernel = functools.partial(head_kernel, head_size=H, h_pad=Hp,
                               compute_dtype=compute_dtype)

    out_pad = pl.pallas_call(
        kernel,
        out_shape=jax.ShapeDtypeStruct((B, T, Hp), x.dtype),
        grid_spec=pltpu.PrefetchScalarGridSpec(
            num_scalar_prefetch=0,
            grid=(B // Bb,),
            in_specs=[
                pl.BlockSpec((1, 1), lambda b: (0, 0),
                             memory_space=pltpu.MemorySpace.SMEM),    # lamb
                pl.BlockSpec((Bb, T, C), lambda b: (b, 0, 0)),        # x
                pl.BlockSpec((C, 5 * Hp), lambda b: (0, 0)),          # fused W
            ],
            out_specs=pl.BlockSpec((Bb, T, Hp), lambda b: (b, 0, 0)),
        ),
        compiler_params=pltpu.CompilerParams(
            dimension_semantics=("parallel",),
            vmem_limit_bytes=64 * 1024 * 1024),
    )(lamb_arr, x, w_all)

    # TODO(synk): for T >~ 2K, tile the KV axis flash-style (two online-softmax
    # accumulator sets combined as acc1/l1 - lamb*acc2/l2) so the (T, T) score
    # matrices never materialize in VMEM (mandatory on v7x's 64 MiB VMEM).
    return out_pad[:, :, :H]


def head_reference(x, lamb, w_k1, w_q1, w_k2, w_q2, w_v):
    """Plain-JAX reference mirroring the PyTorch forward."""
    k1 = x @ w_k1
    q1 = x @ w_q1
    k2 = x @ w_k2
    q2 = x @ w_q2
    v = x @ w_v
    H = w_k1.shape[1]
    s1 = jnp.einsum("btd,bsd->bts", q1, k1) * H ** -0.5
    s2 = jnp.einsum("btd,bsd->bts", q2, k2) * H ** -0.5
    w1 = jax.nn.softmax(s1, axis=-1)
    w2 = jax.nn.softmax(s2, axis=-1)
    wei = w1 - lamb * w2
    return jnp.einsum("bts,bsd->btd", wei, v)


if __name__ == "__main__":
    # Small shapes consistent with the module: batch=2, seq=8, embed=32, head=16
    B, T, C, H = 2, 8, 32, 16
    lamb = 0.5

    key = jax.random.PRNGKey(0)
    kx, k1, k2, k3, k4, k5 = jax.random.split(key, 6)

    x = jax.random.normal(kx, (B, T, C), dtype=jnp.float32)

    # nn.Linear default init is U(-1/sqrt(C), 1/sqrt(C)); weights stored as
    # (C, H) (already transposed relative to PyTorch's (H, C)).
    bound = 1.0 / math.sqrt(C)

    def init_w(k):
        return jax.random.uniform(k, (C, H), dtype=jnp.float32,
                                  minval=-bound, maxval=bound)

    w_k1, w_q1, w_k2, w_q2, w_v = (init_w(k) for k in (k1, k2, k3, k4, k5))

    ref = head_reference(x, lamb, w_k1, w_q1, w_k2, w_q2, w_v)

    # f32 MXU path: tight correctness check.
    out_f32 = jax.block_until_ready(
        head_forward(x, lamb, w_k1, w_q1, w_k2, w_q2, w_v,
                     compute_dtype=jnp.float32))
    assert out_f32.shape == (B, T, H)
    assert jnp.allclose(out_f32, ref, atol=1e-4, rtol=1e-4), "f32 mismatch"

    # bf16 MXU fast path (default): softmax/difference stay f32, loose check.
    out_bf16 = jax.block_until_ready(
        head_forward(x, lamb, w_k1, w_q1, w_k2, w_q2, w_v,
                     compute_dtype=jnp.bfloat16))
    assert out_bf16.shape == (B, T, H)
    assert jnp.allclose(out_bf16, ref, atol=5e-2, rtol=5e-2), "bf16 mismatch"

    print("KERNEL_OK")
</pallas_src>

<mosaic_0001>
module attributes {stable_mosaic.version = 11 : i64} {
  func.func @head_kernel(%arg0: i32, %arg1: memref<1x1xf32, #tpu.memory_space<smem>>, %arg2: memref<2x8x32xf32, #tpu.memory_space<vmem>>, %arg3: memref<32x640xf32, #tpu.memory_space<vmem>>, %arg4: memref<2x8x128xf32, #tpu.memory_space<vmem>>) attributes {dimension_semantics = [#tpu.dimension_semantics<parallel>], iteration_bounds = array<i64: 1>, scalar_prefetch = 0 : i64, scratch_operands = 0 : i64, tpu.core_type = #tpu.core_type<tc>, window_params = [{transform_indices = @transform_0, window_bounds = array<i64: 1, 1>}, {transform_indices = @transform_1, window_bounds = array<i64: 2, 8, 32>}, {pipeline_mode = #tpu.pipeline_mode<synchronous>, transform_indices = @transform_2, window_bounds = array<i64: 32, 640>}, {transform_indices = @transform_3, window_bounds = array<i64: 2, 8, 128>}]} {
    %c0 = arith.constant 0 : index
    %c0_0 = arith.constant 0 : index
    %c0_1 = arith.constant 0 : index
    %0 = vector.load %arg2[%c0, %c0_0, %c0_1] : memref<2x8x32xf32, #tpu.memory_space<vmem>>, vector<2x8x32xf32>
    %c0_2 = arith.constant 0 : index
    %c0_3 = arith.constant 0 : index
    %1 = vector.load %arg3[%c0_2, %c0_3] : memref<32x640xf32, #tpu.memory_space<vmem>>, vector<32x640xf32>
    %cst = arith.constant dense<0.000000e+00> : vector<2x8x640xf32>
    %2 = tpu.matmul %0, %1, %cst {dimension_numbers = #tpu.dot_dimension_numbers<[2], [0], [0, 1], [1], [0, 0, 0, 1, 1, 1], [], []>} : vector<2x8x32xf32>, vector<32x640xf32>, vector<2x8x640xf32> -> vector<2x8x640xf32>
    %3 = vector.extract_strided_slice %2 {offsets = [0, 0, 0], sizes = [2, 8, 128], strides = [1, 1, 1]} : vector<2x8x640xf32> to vector<2x8x128xf32>
    %4 = vector.extract_strided_slice %2 {offsets = [0, 0, 128], sizes = [2, 8, 128], strides = [1, 1, 1]} : vector<2x8x640xf32> to vector<2x8x128xf32>
    %5 = vector.extract_strided_slice %2 {offsets = [0, 0, 256], sizes = [2, 8, 128], strides = [1, 1, 1]} : vector<2x8x640xf32> to vector<2x8x128xf32>
    %6 = vector.extract_strided_slice %2 {offsets = [0, 0, 384], sizes = [2, 8, 128], strides = [1, 1, 1]} : vector<2x8x640xf32> to vector<2x8x128xf32>
    %7 = vector.extract_strided_slice %2 {offsets = [0, 0, 512], sizes = [2, 8, 128], strides = [1, 1, 1]} : vector<2x8x640xf32> to vector<2x8x128xf32>
    %cst_4 = arith.constant dense<0.000000e+00> : vector<2x8x8xf32>
    %8 = tpu.matmul %4, %3, %cst_4 {dimension_numbers = #tpu.dot_dimension_numbers<[2], [2], [1], [1], [0, 0, 0, 1, 1, 1], [0], [0]>} : vector<2x8x128xf32>, vector<2x8x128xf32>, vector<2x8x8xf32> -> vector<2x8x8xf32>
    %cst_5 = arith.constant 2.500000e-01 : f32
    %9 = vector.broadcast %cst_5 : f32 to vector<2x8x8xf32>
    %10 = arith.mulf %8, %9 : vector<2x8x8xf32>
    %cst_6 = arith.constant dense<0.000000e+00> : vector<2x8x8xf32>
    %11 = tpu.matmul %6, %5, %cst_6 {dimension_numbers = #tpu.dot_dimension_numbers<[2], [2], [1], [1], [0, 0, 0, 1, 1, 1], [0], [0]>} : vector<2x8x128xf32>, vector<2x8x128xf32>, vector<2x8x8xf32> -> vector<2x8x8xf32>
    %cst_7 = arith.constant 2.500000e-01 : f32
    %12 = vector.broadcast %cst_7 : f32 to vector<2x8x8xf32>
    %13 = arith.mulf %11, %12 : vector<2x8x8xf32>
    %cst_8 = arith.constant dense<0xFF800000> : vector<2x8xf32>
    %14 = vector.multi_reduction <maximumf>, %10, %cst_8 [2] : vector<2x8x8xf32> to vector<2x8xf32>
    %15 = vector.shape_cast %14 : vector<2x8xf32> to vector<2x8x1xf32>
    %16 = vector.broadcast %15 : vector<2x8x1xf32> to vector<2x8x8xf32>
    %17 = arith.subf %10, %16 : vector<2x8x8xf32>
    %18 = math.exp %17 : vector<2x8x8xf32>
    %cst_9 = arith.constant dense<0.000000e+00> : vector<2x8xf32>
    %19 = vector.multi_reduction <add>, %18, %cst_9 [2] : vector<2x8x8xf32> to vector<2x8xf32>
    %20 = vector.shape_cast %19 : vector<2x8xf32> to vector<2x8x1xf32>
    %21 = tpu.reciprocal %20 : vector<2x8x1xf32> -> vector<2x8x1xf32>
    %22 = vector.broadcast %21 : vector<2x8x1xf32> to vector<2x8x8xf32>
    %23 = arith.mulf %18, %22 : vector<2x8x8xf32>
    %cst_10 = arith.constant dense<0xFF800000> : vector<2x8xf32>
    %24 = vector.multi_reduction <maximumf>, %13, %cst_10 [2] : vector<2x8x8xf32> to vector<2x8xf32>
    %25 = vector.shape_cast %24 : vector<2x8xf32> to vector<2x8x1xf32>
    %26 = vector.broadcast %25 : vector<2x8x1xf32> to vector<2x8x8xf32>
    %27 = arith.subf %13, %26 : vector<2x8x8xf32>
    %28 = math.exp %27 : vector<2x8x8xf32>
    %cst_11 = arith.constant dense<0.000000e+00> : vector<2x8xf32>
    %29 = vector.multi_reduction <add>, %28, %cst_11 [2] : vector<2x8x8xf32> to vector<2x8xf32>
    %30 = vector.shape_cast %29 : vector<2x8xf32> to vector<2x8x1xf32>
    %31 = tpu.reciprocal %30 : vector<2x8x1xf32> -> vector<2x8x1xf32>
    %32 = vector.broadcast %31 : vector<2x8x1xf32> to vector<2x8x8xf32>
    %33 = arith.mulf %28, %32 : vector<2x8x8xf32>
    %c0_12 = arith.constant 0 : index
    %c0_13 = arith.constant 0 : index
    %34 = memref.load %arg1[%c0_12, %c0_13] : memref<1x1xf32, #tpu.memory_space<smem>>
    %35 = vector.broadcast %34 : f32 to vector<2x8x8xf32>
    %36 = arith.mulf %35, %33 : vector<2x8x8xf32>
    %37 = arith.subf %23, %36 : vector<2x8x8xf32>
    %cst_14 = arith.constant dense<0.000000e+00> : vector<2x8x128xf32>
    %38 = tpu.matmul %37, %7, %cst_14 {dimension_numbers = #tpu.dot_dimension_numbers<[2], [1], [1], [2], [0, 0, 0, 1, 1, 2], [0], [0]>} : vector<2x8x8xf32>, vector<2x8x128xf32>, vector<2x8x128xf32> -> vector<2x8x128xf32>
    %c0_15 = arith.constant 0 : index
    %c0_16 = arith.constant 0 : index
    %c0_17 = arith.constant 0 : index
    %39 = vector.load %arg4[%c0_15, %c0_16, %c0_17] : memref<2x8x128xf32, #tpu.memory_space<vmem>>, vector<2x8x128xf32>
    tpu.vector_store %arg4[%c0_15, %c0_16, %c0_17], %38 {strides = array<i32>} : memref<2x8x128xf32, #tpu.memory_space<vmem>>, vector<2x8x128xf32>,
    return
  }
  func.func @transform_0(%arg0: i32) -> (i32, i32) {
    %c0_i32 = arith.constant 0 : i32
    %c0_i32_0 = arith.constant 0 : i32
    %c0_i32_1 = arith.constant 0 : i32
    return %c0_i32, %c0_i32_0 : i32, i32
  }
  func.func @transform_1(%arg0: i32) -> (i32, i32, i32) {
    %c0_i32 = arith.constant 0 : i32
    %c0_i32_0 = arith.constant 0 : i32
    %c0_i32_1 = arith.constant 0 : i32
    return %arg0, %c0_i32, %c0_i32_0 : i32, i32, i32
  }
  func.func @transform_2(%arg0: i32) -> (i32, i32) {
    %c0_i32 = arith.constant 0 : i32
    %c0_i32_0 = arith.constant 0 : i32
    %c0_i32_1 = arith.constant 0 : i32
    return %c0_i32, %c0_i32_0 : i32, i32
  }
  func.func @transform_3(%arg0: i32) -> (i32, i32, i32) {
    %c0_i32 = arith.constant 0 : i32
    %c0_i32_0 = arith.constant 0 : i32
    %c0_i32_1 = arith.constant 0 : i32
    return %arg0, %c0_i32, %c0_i32_0 : i32, i32, i32
  }
}

</mosaic_0001>

<llo_original>
// kernel: tpu_custom_call.1
$region0: #{tpu_custom_call.1}
  #allocation0 [shape = 'u32[]', space=smem, size = 0x4, offset = 0x4, fixed_abs, tag = 'smem constant byte address 0x4 - core index']
  #allocation1 [shape = 'u32[72,128]{1,0:T(1,128)}', space=vmem, size = 0x9000, scoped, tag = 'internal scratch']
  #allocation2 [shape = 'f32[1,1]{1,0:T(1,128)S(6)}', space=smem, size = 0x200, scoped, tag = 'scoped memory for tpu_custom_call.1']
  %s0 = inlined_call_operand.<no memory space> [shape: f32[1,1], index: 0, kind: input, shape index: {}]
  %s1 = inlined_call_operand.hbm [shape: f32[2,8,32], index: 1, kind: input, shape index: {}]
  %s2 = inlined_call_operand.hbm [shape: f32[32,640], index: 2, kind: input, shape index: {}]
  %s3 = inlined_call_operand.hbm [shape: f32[2,8,128], index: 3, kind: output, shape index: {}]
  %s4 = sld [smem:[#allocation0]]
  $region30: #{tpu_custom_call.1} parent=0
    _
  %s6 = ssub.s32 1, %s4
  %s7 = scalar_select 0, %s6, %s4
  %8 = sst [smem:[#allocation2]] %s0
  $region1: #{tpu_custom_call.1} parent=0
    #allocation3 [shape = 'u8[8192]{0}', space=vmem, size = 0x2000, scoped, tag = 'input window, operand 1, single buffered']
    #allocation4 [shape = 's32[1]{0}', space=sflag, size = 0x4, scoped, tag = 'scoped memory for tpu_custom_call.1']
    #allocation5 [shape = 's32[1]{0}', space=sflag, size = 0x4, scoped, tag = 'scoped memory for tpu_custom_call.1']
    #allocation6 [shape = 'u8[81920]{0}', space=vmem, size = 0x14000, scoped, tag = 'input window, operand 2, single buffered']
    #allocation7 [shape = 's32[1]{0}', space=sflag, size = 0x4, scoped, tag = 'scoped memory for tpu_custom_call.1']
    #allocation8 [shape = 'u8[8192]{0}', space=vmem, size = 0x2000, scoped, tag = 'output window, operand 0, single buffered']
    %9 = vsyncpa [#allocation4], 0
    %10 = vsyncpa [#allocation7], 0
    %11 = vsyncpa [#allocation5], 0
    // Predicated region
    $region2: #{tpu_custom_call.1} parent=1 // pred_check
      _
    $region3: #{tpu_custom_call.1} parent=1 // pred_check_branch
      %13 = sbr.rel (0) target = $region5
    $region4: #{tpu_custom_call.1} parent=1 // pred_region
      _
    $region5: #{tpu_custom_call.1} parent=1 // pred_fallthru
      _
    // Predicated region
    $region6: #{tpu_custom_call.1} parent=1 // pred_check
      _
    $region7: #{tpu_custom_call.1} parent=1 // pred_check_branch
      %15 = sbr.rel (0) target = $region9
    $region8: #{tpu_custom_call.1} parent=1 // pred_region
      %17 = vsyncadd [#allocation4], 0
      %s18 = sshll.u32 %s1, 4
      %s19 = int_to_ptr.hbm [resolvable:$true] %s18
      %s20 = sshll.u32 [#allocation3], 4
      %s21 = int_to_ptr.vmem [resolvable:$true] %s20
      %26 = dma.hbm_to_vmem [thread:$0]  %s19, 256, %s21, [#allocation4], 128, 128, 8
    $region9: #{tpu_custom_call.1} parent=1 // pred_fallthru
      _
    // Predicated region
    $region10: #{tpu_custom_call.1} parent=1 // pred_check
      _
    $region11: #{tpu_custom_call.1} parent=1 // pred_check_branch
      %28 = sbr.rel (0) target = $region13
    $region12: #{tpu_custom_call.1} parent=1 // pred_region
      %30 = vsyncadd [#allocation7], 0
      %s31 = sshll.u32 %s2, 4
      %s32 = int_to_ptr.hbm [resolvable:$true] %s31
      %s33 = sshll.u32 [#allocation6], 4
      %s34 = int_to_ptr.vmem [resolvable:$true] %s33
      %39 = dma.hbm_to_vmem [thread:$0]  %s32, 2560, %s34, [#allocation7], 640, 640, 40
    $region13: #{tpu_custom_call.1} parent=1 // pred_fallthru
      _
    // Predicated region
    $region14: #{tpu_custom_call.1} parent=1 // pred_check
      _
    $region15: #{tpu_custom_call.1} parent=1 // pred_check_branch
      %41 = sbr.rel (0) target = $region17
    $region16: #{tpu_custom_call.1} parent=1 // pred_region
      %43 = dma.done [#allocation4], 256
    $region17: #{tpu_custom_call.1} parent=1 // pred_fallthru
      _
    // Predicated region
    $region18: #{tpu_custom_call.1} parent=1 // pred_check
      _
    $region19: #{tpu_custom_call.1} parent=1 // pred_check_branch
      %45 = sbr.rel (0) target = $region21
    $region20: #{tpu_custom_call.1} parent=1 // pred_region
      %47 = dma.done [#allocation7], 2560
    $region21: #{tpu_custom_call.1} parent=1 // pred_fallthru
      _
    %v48 = vld [vmem:[#allocation3] sm:$0xff]
    %v49 = vld [vmem:[#allocation3 + $0x8] sm:$0xff]
    %v50 = vld [vmem:[#allocation6] sm:$0xff]
    %v51 = vld [vmem:[#allocation6 + $0x8] sm:$0xff]
    %v52 = vld [vmem:[#allocation6 + $0x10] sm:$0xff]
    %v53 = vld [vmem:[#allocation6 + $0x18] sm:$0xff]
    %v54 = vld [vmem:[#allocation6 + $0x20] sm:$0xff]
    %v55 = vld [vmem:[#allocation6 + $0x28] sm:$0xff]
    %v56 = vld [vmem:[#allocation6 + $0x30] sm:$0xff]
    %v57 = vld [vmem:[#allocation6 + $0x38] sm:$0xff]
    %v58 = vld [vmem:[#allocation6 + $0x40] sm:$0xff]
    %v59 = vld [vmem:[#allocation6 + $0x48] sm:$0xff]
    %v60 = vld [vmem:[#allocation6 + $0x50] sm:$0xff]
    %v61 = vld [vmem:[#allocation6 + $0x58] sm:$0xff]
    %v62 = vld [vmem:[#allocation6 + $0x60] sm:$0xff]
    %v63 = vld [vmem:[#allocation6 + $0x68] sm:$0xff]
    %v64 = vld [vmem:[#allocation6 + $0x70] sm:$0xff]
    %v65 = vld [vmem:[#allocation6 + $0x78] sm:$0xff]
    %v66 = vld [vmem:[#allocation6 + $0x80] sm:$0xff]
    %v67 = vld [vmem:[#allocation6 + $0x88] sm:$0xff]
    %v68 = vld [vmem:[#allocation6 + $0x90] sm:$0xff]
    %v69 = vld [vmem:[#allocation6 + $0x98] sm:$0xff]
    %vm70 = vcmask 261120
    %v72 = vsel %vm70, %v48, 0
    %v75 = vsel %vm70, %v49, 0
    %77 = vmatpush.msra.mxu0 0.0
    %78 = vmatpush.msra.mxu0 0.0
    %79 = vmatpush.msra.mxu0 0.0
    %80 = vmatpush.msra.mxu0 0.0
    %81 = vmatpush.msra.mxu0 0.0
    %82 = vmatpush.msra.mxu0 0.0
    %83 = vmatpush.msra.mxu0 0.0
    %84 = vmatpush.msra.mxu0 0.0
    %85 = vmatpush.msra.mxu0 0.0
    %86 = vmatpush.msra.mxu0 0.0
    %87 = vmatpush.msra.mxu0 0.0
    %88 = vmatpush.msra.mxu0 0.0
    %89 = vmatpush.msra.mxu0 %v65
    %90 = vmatpush.msra.mxu0 %v60
    %91 = vmatpush.msra.mxu0 %v55
    %92 = vmatpush.msra.mxu0 %v50
    %93 = vmatmul.f32.gmra.mxu0 %v72
    %v94 = vpop.f32.mrf.mxu0
    %v95 = vadd.f32 0.0, %v94
    %96 = vmatmul.f32.gmra.mxu0 %v75
    %v97 = vpop.f32.mrf.mxu0
    %v98 = vadd.f32 0.0, %v97
    %99 = vdwg.mxu0
    %100 = vmatpush.msra.mxu0 0.0
    %101 = vmatpush.msra.mxu0 0.0
    %102 = vmatpush.msra.mxu0 0.0
    %103 = vmatpush.msra.mxu0 0.0
    %104 = vmatpush.msra.mxu0 0.0
    %105 = vmatpush.msra.mxu0 0.0
    %106 = vmatpush.msra.mxu0 0.0
    %107 = vmatpush.msra.mxu0 0.0
    %108 = vmatpush.msra.mxu0 0.0
    %109 = vmatpush.msra.mxu0 0.0
    %110 = vmatpush.msra.mxu0 0.0
    %111 = vmatpush.msra.mxu0 0.0
    %112 = vmatpush.msra.mxu0 %v66
    %113 = vmatpush.msra.mxu0 %v61
    %114 = vmatpush.msra.mxu0 %v56
    %115 = vmatpush.msra.mxu0 %v51
    %116 = vmatmul.f32.gmra.mxu0 %v72
    %v117 = vpop.f32.mrf.mxu0
    %v118 = vadd.f32 0.0, %v117
    %119 = vmatmul.f32.gmra.mxu0 %v75
    %v120 = vpop.f32.mrf.mxu0
    %v121 = vadd.f32 0.0, %v120
    %122 = vdwg.mxu0
    %123 = vmatpush.msra.mxu0 0.0
    %124 = vmatpush.msra.mxu0 0.0
    %125 = vmatpush.msra.mxu0 0.0
    %126 = vmatpush.msra.mxu0 0.0
    %127 = vmatpush.msra.mxu0 0.0
    %128 = vmatpush.msra.mxu0 0.0
    %129 = vmatpush.msra.mxu0 0.0
    %130 = vmatpush.msra.mxu0 0.0
    %131 = vmatpush.msra.mxu0 0.0
    %132 = vmatpush.msra.mxu0 0.0
    %133 = vmatpush.msra.mxu0 0.0
    %134 = vmatpush.msra.mxu0 0.0
    %135 = vmatpush.msra.mxu0 %v67
    %136 = vmatpush.msra.mxu0 %v62
    %137 = vmatpush.msra.mxu0 %v57
    %138 = vmatpush.msra.mxu0 %v52
    %139 = vmatmul.f32.gmra.mxu0 %v72
    %v140 = vpop.f32.mrf.mxu0
    %v141 = vadd.f32 0.0, %v140
    %142 = vmatmul.f32.gmra.mxu0 %v75
    %v143 = vpop.f32.mrf.mxu0
    %v144 = vadd.f32 0.0, %v143
    %145 = vdwg.mxu0
    %146 = vmatpush.msra.mxu0 0.0
    %147 = vmatpush.msra.mxu0 0.0
    %148 = vmatpush.msra.mxu0 0.0
    %149 = vmatpush.msra.mxu0 0.0
    %150 = vmatpush.msra.mxu0 0.0
    %151 = vmatpush.msra.mxu0 0.0
    %152 = vmatpush.msra.mxu0 0.0
    %153 = vmatpush.msra.mxu0 0.0
    %154 = vmatpush.msra.mxu0 0.0
    %155 = vmatpush.msra.mxu0 0.0
    %156 = vmatpush.msra.mxu0 0.0
    %157 = vmatpush.msra.mxu0 0.0
    %158 = vmatpush.msra.mxu0 %v68
    %159 = vmatpush.msra.mxu0 %v63
    %160 = vmatpush.msra.mxu0 %v58
    %161 = vmatpush.msra.mxu0 %v53
    %162 = vmatmul.f32.gmra.mxu0 %v72
    %v163 = vpop.f32.mrf.mxu0
    %v164 = vadd.f32 0.0, %v163
    %165 = vmatmul.f32.gmra.mxu0 %v75
    %v166 = vpop.f32.mrf.mxu0
    %v167 = vadd.f32 0.0, %v166
    %168 = vdwg.mxu0
    %169 = vmatpush.msra.mxu0 0.0
    %170 = vmatpush.msra.mxu0 0.0
    %171 = vmatpush.msra.mxu0 0.0
    %172 = vmatpush.msra.mxu0 0.0
    %173 = vmatpush.msra.mxu0 0.0
    %174 = vmatpush.msra.mxu0 0.0
    %175 = vmatpush.msra.mxu0 0.0
    %176 = vmatpush.msra.mxu0 0.0
    %177 = vmatpush.msra.mxu0 0.0
    %178 = vmatpush.msra.mxu0 0.0
    %179 = vmatpush.msra.mxu0 0.0
    %180 = vmatpush.msra.mxu0 0.0
    %181 = vmatpush.msra.mxu0 %v69
    %182 = vmatpush.msra.mxu0 %v64
    %183 = vmatpush.msra.mxu0 %v59
    %184 = vmatpush.msra.mxu0 %v54
    %185 = vmatmul.f32.gmra.mxu0 %v72
    %v186 = vpop.f32.mrf.mxu0
    %v187 = vadd.f32 0.0, %v186
    %188 = vmatmul.f32.gmra.mxu0 %v75
    %v189 = vpop.f32.mrf.mxu0
    %v190 = vadd.f32 0.0, %v189
    %191 = vdwg.mxu0
    %192 = vmatpush.xpose.msra.mxu0 0.0
    %193 = vmatpush.xpose.msra.mxu0 0.0
    %194 = vmatpush.xpose.msra.mxu0 0.0
    %195 = vmatpush.xpose.msra.mxu0 0.0
    %196 = vmatpush.xpose.msra.mxu0 0.0
    %197 = vmatpush.xpose.msra.mxu0 0.0
    %198 = vmatpush.xpose.msra.mxu0 0.0
    %199 = vmatpush.xpose.msra.mxu0 0.0
    %200 = vmatpush.xpose.msra.mxu0 0.0
    %201 = vmatpush.xpose.msra.mxu0 0.0
    %202 = vmatpush.xpose.msra.mxu0 0.0
    %203 = vmatpush.xpose.msra.mxu0 0.0
    %204 = vmatpush.xpose.msra.mxu0 0.0
    %205 = vmatpush.xpose.msra.mxu0 0.0
    %206 = vmatpush.xpose.msra.mxu0 0.0
    %207 = vmatpush.xpose.msra.mxu0 %v95
    %208 = vmatmul.f32.gmra.mxu0 %v118
    %v209 = vpop.f32.mrf.mxu0
    %v210 = vadd.f32 0.0, %v209
    %211 = vdwg.mxu0
    %212 = vmatpush.xpose.msra.mxu0 0.0
    %213 = vmatpush.xpose.msra.mxu0 0.0
    %214 = vmatpush.xpose.msra.mxu0 0.0
    %215 = vmatpush.xpose.msra.mxu0 0.0
    %216 = vmatpush.xpose.msra.mxu0 0.0
    %217 = vmatpush.xpose.msra.mxu0 0.0
    %218 = vmatpush.xpose.msra.mxu0 0.0
    %219 = vmatpush.xpose.msra.mxu0 0.0
    %220 = vmatpush.xpose.msra.mxu0 0.0
    %221 = vmatpush.xpose.msra.mxu0 0.0
    %222 = vmatpush.xpose.msra.mxu0 0.0
    %223 = vmatpush.xpose.msra.mxu0 0.0
    %224 = vmatpush.xpose.msra.mxu0 0.0
    %225 = vmatpush.xpose.msra.mxu0 0.0
    %226 = vmatpush.xpose.msra.mxu0 0.0
    %227 = vmatpush.xpose.msra.mxu0 %v98
    %228 = vmatmul.f32.gmra.mxu0 %v121
    %v229 = vpop.f32.mrf.mxu0
    %v230 = vadd.f32 0.0, %v229
    %231 = vdwg.mxu0
    %v232 = vmul.f32 %v210, 0.25
    %v233 = vmul.f32 %v230, 0.25
    %234 = vmatpush.xpose.msra.mxu0 0.0
    %235 = vmatpush.xpose.msra.mxu0 0.0
    %236 = vmatpush.xpose.msra.mxu0 0.0
    %237 = vmatpush.xpose.msra.mxu0 0.0
    %238 = vmatpush.xpose.msra.mxu0 0.0
    %239 = vmatpush.xpose.msra.mxu0 0.0
    %240 = vmatpush.xpose.msra.mxu0 0.0
    %241 = vmatpush.xpose.msra.mxu0 0.0
    %242 = vmatpush.xpose.msra.mxu0 0.0
    %243 = vmatpush.xpose.msra.mxu0 0.0
    %244 = vmatpush.xpose.msra.mxu0 0.0
    %245 = vmatpush.xpose.msra.mxu0 0.0
    %246 = vmatpush.xpose.msra.mxu0 0.0
    %247 = vmatpush.xpose.msra.mxu0 0.0
    %248 = vmatpush.xpose.msra.mxu0 0.0
    %249 = vmatpush.xpose.msra.mxu0 %v141
    %250 = vmatmul.f32.gmra.mxu0 %v164
    %v251 = vpop.f32.mrf.mxu0
    %v252 = vadd.f32 0.0, %v251
    %253 = vdwg.mxu0
    %254 = vmatpush.xpose.msra.mxu0 0.0
    %255 = vmatpush.xpose.msra.mxu0 0.0
    %256 = vmatpush.xpose.msra.mxu0 0.0
    %257 = vmatpush.xpose.msra.mxu0 0.0
    %258 = vmatpush.xpose.msra.mxu0 0.0
    %259 = vmatpush.xpose.msra.mxu0 0.0
    %260 = vmatpush.xpose.msra.mxu0 0.0
    %261 = vmatpush.xpose.msra.mxu0 0.0
    %262 = vmatpush.xpose.msra.mxu0 0.0
    %263 = vmatpush.xpose.msra.mxu0 0.0
    %264 = vmatpush.xpose.msra.mxu0 0.0
    %265 = vmatpush.xpose.msra.mxu0 0.0
    %266 = vmatpush.xpose.msra.mxu0 0.0
    %267 = vmatpush.xpose.msra.mxu0 0.0
    %268 = vmatpush.xpose.msra.mxu0 0.0
    %269 = vmatpush.xpose.msra.mxu0 %v144
    %270 = vmatmul.f32.gmra.mxu0 %v167
    %v271 = vpop.f32.mrf.mxu0
    %v272 = vadd.f32 0.0, %v271
    %273 = vdwg.mxu0
    %v274 = vmul.f32 %v252, 0.25
    %v275 = vmul.f32 %v272, 0.25
    %vm276 = vcmask 64512
    %v277 = vsel %vm276, %v232, -inf
    %278 = vmax.xlane.f32.xlu0 %v277
    %v279 = vpop.xlane.xlu0 %278
    %v280 = vsel %vm276, %v233, -inf
    %281 = vmax.xlane.f32.xlu0 %v280
    %v282 = vpop.xlane.xlu0 %281
    %v283 = vsub.f32 %v232, %v279
    %v284 = vsub.f32 %v233, %v282
    %v285 = vmul.f32 %v283, 1.442695
    %v286 = vpow.pop %v285
    %v287 = vmul.f32 %v284, 1.442695
    %v288 = vpow.pop %v287
    %v289 = vsel %vm276, %v286, 0.0
    %290 = vadd.xlane.f32.xlu0 %v289
    %v291 = vpop.xlane.xlu0 %290
    %v292 = vsel %vm276, %v288, 0.0
    %293 = vadd.xlane.f32.xlu0 %v292
    %v294 = vpop.xlane.xlu0 %293
    %v295 = vrcp.pop %v291
    %v296 = vmul.f32 %v291, %v295
    %v297 = vsub.f32 1.0, %v296
    %v298 = vmul.f32 %v295, %v297
    %v299 = vadd.f32 %v295, %v298
    %vm300 = vweird.f32 %v291
    %vm301 = vweird.f32 %v295
    %vm302 = vmor %vm300, %vm301
    %v303 = vsel %vm302, %v295, %v299
    %v304 = vand.u32 2147483647, %v291
    %vm305 = vcmp.eq.f32.partialorder %v304, 8.507059e+37
    %v306 = vand.u32 %v291, 2147483648
    %v307 = vor.u32 1.1754944e-38, %v306
    %v308 = vsel %vm305, %v307, %v303
    %v309 = vrcp.pop %v294
    %v310 = vmul.f32 %v294, %v309
    %v311 = vsub.f32 1.0, %v310
    %v312 = vmul.f32 %v309, %v311
    %v313 = vadd.f32 %v309, %v312
    %vm314 = vweird.f32 %v294
    %vm315 = vweird.f32 %v309
    %vm316 = vmor %vm314, %vm315
    %v317 = vsel %vm316, %v309, %v313
    %v318 = vand.u32 2147483647, %v294
    %vm319 = vcmp.eq.f32.partialorder %v318, 8.507059e+37
    %v320 = vand.u32 %v294, 2147483648
    %v321 = vor.u32 1.1754944e-38, %v320
    %v322 = vsel %vm319, %v321, %v317
    %v323 = vmul.f32 %v286, %v308
    %v324 = vmul.f32 %v288, %v322
    %v325 = vsel %vm276, %v274, -inf
    %326 = vmax.xlane.f32.xlu0 %v325
    %v327 = vpop.xlane.xlu0 %326
    %v328 = vsel %vm276, %v275, -inf
    %329 = vmax.xlane.f32.xlu0 %v328
    %v330 = vpop.xlane.xlu0 %329
    %v331 = vsub.f32 %v274, %v327
    %v332 = vsub.f32 %v275, %v330
    %v333 = vmul.f32 %v331, 1.442695
    %v334 = vpow.pop %v333
    %v335 = vmul.f32 %v332, 1.442695
    %v336 = vpow.pop %v335
    %v337 = vsel %vm276, %v334, 0.0
    %338 = vadd.xlane.f32.xlu0 %v337
    %v339 = vpop.xlane.xlu0 %338
    %v340 = vsel %vm276, %v336, 0.0
    %341 = vadd.xlane.f32.xlu0 %v340
    %v342 = vpop.xlane.xlu0 %341
    %v343 = vrcp.pop %v339
    %v344 = vmul.f32 %v339, %v343
    %v345 = vsub.f32 1.0, %v344
    %v346 = vmul.f32 %v343, %v345
    %v347 = vadd.f32 %v343, %v346
    %vm348 = vweird.f32 %v339
    %vm349 = vweird.f32 %v343
    %vm350 = vmor %vm348, %vm349
    %v351 = vsel %vm350, %v343, %v347
    %v352 = vand.u32 2147483647, %v339
    %vm353 = vcmp.eq.f32.partialorder %v352, 8.507059e+37
    %v354 = vand.u32 %v339, 2147483648
    %v355 = vor.u32 1.1754944e-38, %v354
    %v356 = vsel %vm353, %v355, %v351
    %v357 = vrcp.pop %v342
    %v358 = vmul.f32 %v342, %v357
    %v359 = vsub.f32 1.0, %v358
    %v360 = vmul.f32 %v357, %v359
    %v361 = vadd.f32 %v357, %v360
    %vm362 = vweird.f32 %v342
    %vm363 = vweird.f32 %v357
    %vm364 = vmor %vm362, %vm363
    %v365 = vsel %vm364, %v357, %v361
    %v366 = vand.u32 2147483647, %v342
    %vm367 = vcmp.eq.f32.partialorder %v366, 8.507059e+37
    %v368 = vand.u32 %v342, 2147483648
    %v369 = vor.u32 1.1754944e-38, %v368
    %v370 = vsel %vm367, %v369, %v365
    %v371 = vmul.f32 %v334, %v356
    %v372 = vmul.f32 %v336, %v370
    %s373 = sld [smem:[#allocation2]]
    %v374 = vstv %s373
    %v375 = vmul.f32 %v374, %v371
    %v376 = vmul.f32 %v374, %v372
    %v377 = vsub.f32 %v323, %v375
    %v378 = vsub.f32 %v324, %v376
    %v380 = vsel %vm276, %v377, 0
    %382 = vmatpush.msra.mxu0 0.0
    %383 = vmatpush.msra.mxu0 0.0
    %384 = vmatpush.msra.mxu0 0.0
    %385 = vmatpush.msra.mxu0 0.0
    %386 = vmatpush.msra.mxu0 0.0
    %387 = vmatpush.msra.mxu0 0.0
    %388 = vmatpush.msra.mxu0 0.0
    %389 = vmatpush.msra.mxu0 0.0
    %390 = vmatpush.msra.mxu0 0.0
    %391 = vmatpush.msra.mxu0 0.0
    %392 = vmatpush.msra.mxu0 0.0
    %393 = vmatpush.msra.mxu0 0.0
    %394 = vmatpush.msra.mxu0 0.0
    %395 = vmatpush.msra.mxu0 0.0
    %396 = vmatpush.msra.mxu0 0.0
    %397 = vmatpush.msra.mxu0 %v187
    %398 = vmatmul.f32.gmra.mxu0 %v380
    %v399 = vpop.f32.mrf.mxu0
    %v400 = vadd.f32 0.0, %v399
    %401 = vdwg.mxu0
    %v403 = vsel %vm276, %v378, 0
    %405 = vmatpush.msra.mxu0 0.0
    %406 = vmatpush.msra.mxu0 0.0
    %407 = vmatpush.msra.mxu0 0.0
    %408 = vmatpush.msra.mxu0 0.0
    %409 = vmatpush.msra.mxu0 0.0
    %410 = vmatpush.msra.mxu0 0.0
    %411 = vmatpush.msra.mxu0 0.0
    %412 = vmatpush.msra.mxu0 0.0
    %413 = vmatpush.msra.mxu0 0.0
    %414 = vmatpush.msra.mxu0 0.0
    %415 = vmatpush.msra.mxu0 0.0
    %416 = vmatpush.msra.mxu0 0.0
    %417 = vmatpush.msra.mxu0 0.0
    %418 = vmatpush.msra.mxu0 0.0
    %419 = vmatpush.msra.mxu0 0.0
    %420 = vmatpush.msra.mxu0 %v190
    %421 = vmatmul.f32.gmra.mxu0 %v403
    %v422 = vpop.f32.mrf.mxu0
    %v423 = vadd.f32 0.0, %v422
    %424 = vdwg.mxu0
    %425 = vst [vmem:[#allocation8] sm:$0xff] %v400
    %426 = vst [vmem:[#allocation8 + $0x8] sm:$0xff] %v423
    // Predicated region
    $region22: #{tpu_custom_call.1} parent=1 // pred_check
      _
    $region23: #{tpu_custom_call.1} parent=1 // pred_check_branch
      %428 = sbr.rel (0) target = $region25
    $region24: #{tpu_custom_call.1} parent=1 // pred_region
      %430 = vsyncadd [#allocation5], 0
      %s431 = sshll.u32 [#allocation8], 4
      %s432 = int_to_ptr.vmem [resolvable:$true] %s431
      %s433 = sshll.u32 %s3, 4
      %s434 = int_to_ptr.hbm [resolvable:$true] %s433
      %439 = dma.vmem_to_hbm [thread:$0]  %s432, 256, %s434, [#allocation5], 128, 128, 8
    $region25: #{tpu_custom_call.1} parent=1 // pred_fallthru
      _
    // Predicated region
    $region26: #{tpu_custom_call.1} parent=1 // pred_check
      _
    $region27: #{tpu_custom_call.1} parent=1 // pred_check_branch
      %441 = sbr.rel (0) target = $region29
    $region28: #{tpu_custom_call.1} parent=1 // pred_region
      %443 = dma.done [#allocation5], 256
    $region29: #{tpu_custom_call.1} parent=1 // pred_fallthru
      _
    %444 = vsyncpa [#allocation4], 1
    %445 = vsyncpa [#allocation7], 1
    %446 = vsyncpa [#allocation5], 1

</llo_original>
